<compile_context>
chip_gen: v5e
topology: v5e:2x2
jax: 0.10.0
libtpu: 0.0.40
codegen_flags: <defaults>
</compile_context>

<pallas_src>
import functools

import jax
import jax.numpy as jnp
from jax.experimental import pallas as pl
from jax.experimental.pallas import tpu as pltpu


def _ce_kernel(logits_ref, target_ref, out_ref, *, ignore_label, groups,
               need_tail_mask):
    """One (batch image, pixel-tile) grid step.

    logits_ref: (c, sub, 128)  (input dtype; upcast per class slice)
    target_ref: (sub, 128) int32
    out_ref:    (1, 2, 128) f32  — row 0 = partial loss sum, row 1 = count
    """
    c, sub, _ = logits_ref.shape
    tgt = target_ref[...]                                    # (sub, 128)

    valid = (tgt >= 0) & (tgt != ignore_label)
    if need_tail_mask:
        # Only the last tile can hang over the array; mask OOB sublane-groups.
        i = pl.program_id(1)
        grp = jax.lax.broadcasted_iota(jnp.int32, (sub, 128), 0)
        valid = valid & ((i * sub + grp) < groups)
    safe_tgt = jnp.where(valid, tgt, 0)

    # Pass 1: running max over classes (pure VPU on dense (sub,128) vregs).
    m = logits_ref[0].astype(jnp.float32)
    for k in range(1, c):
        m = jnp.maximum(m, logits_ref[k].astype(jnp.float32))

    # Pass 2: accumulate sum-exp and the target logit (scalar class compare,
    # no 3-D iota, no (c,sub,128) temporaries).
    # NOTE: labels with 0 <= t != ignore_label but t >= c silently contribute
    # loss = lse (target logit treated as 0); PyTorch would raise instead.
    s = jnp.zeros((sub, 128), jnp.float32)
    tgt_logit = jnp.zeros((sub, 128), jnp.float32)
    for k in range(c):
        xk = logits_ref[k].astype(jnp.float32)
        s = s + jnp.exp(xk - m)
        tgt_logit = tgt_logit + jnp.where(safe_tgt == k, xk, 0.0)

    loss = jnp.where(valid, m + jnp.log(s) - tgt_logit, 0.0)  # (sub, 128)

    loss_sum = jnp.sum(loss, axis=0, keepdims=True)                        # (1,128)
    cnt_sum = jnp.sum(jnp.where(valid, 1.0, 0.0), axis=0, keepdims=True)   # (1,128)
    out_ref[...] = jnp.concatenate([loss_sum, cnt_sum], axis=0)[None]      # (1,2,128)


def _pick_tile(groups, c, n, elt_bytes):
    """Pick sublane-group tile `sub` from a VMEM byte budget (generation-aware)."""
    try:
        vmem_cap = int(pltpu.get_tpu_info().vmem_capacity_bytes)
    except Exception:
        vmem_cap = 64 * 1024 * 1024          # conservative: v7x per-TC VMEM

    # ~1/8 of VMEM per logits block -> double-buffered inputs stay well under
    # half of VMEM on every generation (8 MiB blocks on v7x, 16 MiB on v5e/v6e).
    budget = min(16 * 1024 * 1024, max(2 * 1024 * 1024, vmem_cap // 8))

    # Second-minor block dim alignment: 8 for f32, 16 for bf16 (packed rows).
    sub_align = 8 * max(1, 4 // elt_bytes)
    sub = budget // (c * 128 * elt_bytes)
    sub = max(sub_align, (sub // sub_align) * sub_align)

    # Keep >= ~8 grid steps so both TensorCores (v7x megacore) get several
    # steps and the double-buffered pipeline has something to overlap.
    min_steps = 8
    per_image = max(1, -(-min_steps // n))
    cap = -(-groups // per_image)
    cap = max(sub_align, ((cap + sub_align - 1) // sub_align) * sub_align)
    sub = min(sub, cap)
    if sub >= groups:
        sub = groups                          # full second-minor dim is always legal

    # vmem limit from the actual block bytes (2 buffers per operand) + temps.
    logits_blk = c * sub * 128 * elt_bytes
    tgt_blk = sub * 128 * 4
    out_blk = 2 * 128 * 4
    temps = 8 * sub * 128 * 4                 # handful of (sub,128) f32 temps
    vmem_limit = 2 * (logits_blk + tgt_blk + out_blk) + temps + (2 << 20)
    vmem_limit = int(min(max(vmem_limit, 8 * 1024 * 1024), int(vmem_cap * 0.75)))
    return sub, vmem_limit


def cross_entropy_2d_ignore(predict, target, *, ignore_label=255,
                            size_average=True):
    """predict: (n, c, h, w) float; target: (n, h, w) int. Returns scalar loss."""
    # TODO(synk): optional per-class `weight` rescaling is not implemented
    # (module default is weight=None).
    n, c, h, w = predict.shape
    assert target.shape == (n, h, w)
    hw = h * w
    tgt_i32 = target.astype(jnp.int32)

    groups = hw // 128
    hw_main = groups * 128

    total = jnp.float32(0.0)
    count = jnp.float32(0.0)

    if groups > 0:
        logits_flat = predict.reshape(n, c, hw)     # metadata-only reshape
        tgt_flat = tgt_i32.reshape(n, hw)
        if hw_main != hw:
            # TODO(synk): this prefix slice still costs one HBM round trip of
            # the logits when h*w % 128 != 0; feed 128-aligned spatial sizes
            # for the fully zero-copy path.
            logits_main = jax.lax.slice_in_dim(logits_flat, 0, hw_main, axis=2)
            tgt_main = jax.lax.slice_in_dim(tgt_flat, 0, hw_main, axis=1)
        else:
            logits_main, tgt_main = logits_flat, tgt_flat
        logits_main = logits_main.reshape(n, c, groups, 128)
        tgt_main = tgt_main.reshape(n, groups, 128)

        elt_bytes = jnp.dtype(predict.dtype).itemsize
        sub, vmem_limit = _pick_tile(groups, c, n, elt_bytes)
        num_tiles = pl.cdiv(groups, sub)
        nblocks = n * num_tiles
        need_tail_mask = (groups % sub) != 0

        kernel = functools.partial(_ce_kernel, ignore_label=ignore_label,
                                   groups=groups, need_tail_mask=need_tail_mask)

        partials = pl.pallas_call(
            kernel,
            out_shape=jax.ShapeDtypeStruct((nblocks, 2, 128), jnp.float32),
            grid_spec=pltpu.PrefetchScalarGridSpec(
                num_scalar_prefetch=0,
                grid=(n, num_tiles),
                in_specs=[
                    pl.BlockSpec((None, c, sub, 128), lambda b, i: (b, 0, i, 0)),
                    pl.BlockSpec((None, sub, 128), lambda b, i: (b, i, 0)),
                ],
                out_specs=pl.BlockSpec(
                    (1, 2, 128), lambda b, i: (b * num_tiles + i, 0, 0)),
            ),
            compiler_params=pltpu.CompilerParams(
                dimension_semantics=("parallel", "parallel"),
                vmem_limit_bytes=vmem_limit),
        )(logits_main, tgt_main)

        total = total + jnp.sum(partials[:, 0, :])
        count = count + jnp.sum(partials[:, 1, :])

    if hw_main != hw:
        # Ragged tail (< 128 pixels per image): tiny plain-JAX epilogue.
        x_tail = jax.lax.slice_in_dim(predict.reshape(n, c, hw), hw_main, hw,
                                      axis=2).astype(jnp.float32)   # (n,c,r)
        t_tail = jax.lax.slice_in_dim(tgt_i32.reshape(n, hw), hw_main, hw,
                                      axis=1)                        # (n,r)
        v = (t_tail >= 0) & (t_tail != ignore_label)
        m = jnp.max(x_tail, axis=1)
        lse = m + jnp.log(jnp.sum(jnp.exp(x_tail - m[:, None, :]), axis=1))
        safe = jnp.where(v, t_tail, 0)
        tl = jnp.take_along_axis(x_tail, safe[:, None, :], axis=1)[:, 0, :]
        total = total + jnp.sum(jnp.where(v, lse - tl, 0.0))
        count = count + jnp.sum(v.astype(jnp.float32))

    if size_average:
        # PyTorch module returns zeros(1) when no valid target exists.
        return jnp.where(count > 0, total / jnp.maximum(count, 1.0),
                         jnp.float32(0.0))
    return jnp.where(count > 0, total, jnp.float32(0.0))


def _reference_loss(predict, target, ignore_label=255):
    n, c, h, w = predict.shape
    logits = jnp.transpose(predict, (0, 2, 3, 1)).reshape(-1, c)
    tgt = target.reshape(-1).astype(jnp.int32)
    valid = (tgt >= 0) & (tgt != ignore_label)
    lse = jax.scipy.special.logsumexp(logits.astype(jnp.float32), axis=-1)
    safe = jnp.where(valid, tgt, 0)
    tl = jnp.take_along_axis(logits.astype(jnp.float32), safe[:, None],
                             axis=-1)[:, 0]
    loss = jnp.where(valid, lse - tl, 0.0)
    cnt = jnp.sum(valid.astype(jnp.float32))
    return jnp.where(cnt > 0, jnp.sum(loss) / jnp.maximum(cnt, 1.0), 0.0)


if __name__ == "__main__":
    key = jax.random.PRNGKey(0)

    def make_case(k, n, c, h, w, dtype):
        k1, k2, k3 = jax.random.split(k, 3)
        predict = jax.random.normal(k1, (n, c, h, w), dtype=jnp.float32)
        predict = predict.astype(dtype)
        target = jax.random.randint(k2, (n, h, w), 0, c, dtype=jnp.int32)
        drop = jax.random.uniform(k3, (n, h, w))
        target = jnp.where(drop < 0.15, 255, target)       # ignored labels
        target = jnp.where(drop > 0.95, -1, target)        # negative labels
        return predict, target

    cases = [
        (2, 4, 16, 16, jnp.float32),   # hw % 128 == 0, single tile per image
        (2, 4, 32, 40, jnp.float32),   # groups % sub != 0 -> in-kernel tail mask
        (1, 3, 10, 13, jnp.float32),   # ragged hw -> plain-JAX tail epilogue
        (2, 4, 16, 16, jnp.bfloat16),  # bf16 logits streamed without pre-cast
    ]
    keys = jax.random.split(key, len(cases))
    for kk, (n, c, h, w, dtype) in zip(keys, cases):
        predict, target = make_case(kk, n, c, h, w, dtype)
        loss = cross_entropy_2d_ignore(predict, target, ignore_label=255,
                                       size_average=True)
        loss = jax.block_until_ready(loss)
        ref = _reference_loss(predict, target, ignore_label=255)
        assert jnp.allclose(loss, ref, rtol=1e-5, atol=1e-5), (
            str(dtype), (n, c, h, w), loss, ref)

    print("KERNEL_OK")
</pallas_src>

<mosaic_0001>
module attributes {stable_mosaic.version = 11 : i64} {
  func.func @_ce_kernel(%arg0: i32, %arg1: i32, %arg2: memref<1x4x2x128xf32, #tpu.memory_space<vmem>>, %arg3: memref<1x2x128xi32, #tpu.memory_space<vmem>>, %arg4: memref<1x2x128xf32, #tpu.memory_space<vmem>>) attributes {dimension_semantics = [#tpu.dimension_semantics<parallel>, #tpu.dimension_semantics<parallel>], iteration_bounds = array<i64: 2, 1>, scalar_prefetch = 0 : i64, scratch_operands = 0 : i64, tpu.core_type = #tpu.core_type<tc>, window_params = [{transform_indices = @transform_0, window_bounds = array<i64: 1, 4, 2, 128>}, {transform_indices = @transform_1, window_bounds = array<i64: 1, 2, 128>}, {transform_indices = @transform_2, window_bounds = array<i64: 1, 2, 128>}]} {
    %c0 = arith.constant 0 : index
    %c0_0 = arith.constant 0 : index
    %c0_1 = arith.constant 0 : index
    %0 = vector.load %arg3[%c0, %c0_0, %c0_1] : memref<1x2x128xi32, #tpu.memory_space<vmem>>, vector<1x2x128xi32>
    %1 = vector.shape_cast %0 : vector<1x2x128xi32> to vector<2x128xi32>
    %c0_i32 = arith.constant 0 : i32
    %2 = vector.broadcast %c0_i32 : i32 to vector<2x128xi32>
    %3 = arith.cmpi sge, %1, %2 : vector<2x128xi32>
    %c255_i32 = arith.constant 255 : i32
    %4 = vector.broadcast %c255_i32 : i32 to vector<2x128xi32>
    %5 = arith.cmpi ne, %1, %4 : vector<2x128xi32>
    %6 = arith.andi %3, %5 : vector<2x128xi1>
    %c0_i32_2 = arith.constant 0 : i32
    %7 = vector.broadcast %c0_i32_2 : i32 to vector<2x128xi32>
    %8 = arith.select %6, %1, %7 : vector<2x128xi1>, vector<2x128xi32>
    %c0_3 = arith.constant 0 : index
    %c0_4 = arith.constant 0 : index
    %c0_5 = arith.constant 0 : index
    %c0_6 = arith.constant 0 : index
    %9 = vector.load %arg2[%c0_3, %c0_4, %c0_5, %c0_6] : memref<1x4x2x128xf32, #tpu.memory_space<vmem>>, vector<1x1x2x128xf32>
    %10 = vector.shape_cast %9 : vector<1x1x2x128xf32> to vector<2x128xf32>
    %c0_7 = arith.constant 0 : index
    %c1 = arith.constant 1 : index
    %c0_8 = arith.constant 0 : index
    %c0_9 = arith.constant 0 : index
    %11 = vector.load %arg2[%c0_7, %c1, %c0_8, %c0_9] : memref<1x4x2x128xf32, #tpu.memory_space<vmem>>, vector<1x1x2x128xf32>
    %12 = vector.shape_cast %11 : vector<1x1x2x128xf32> to vector<2x128xf32>
    %13 = arith.maximumf %10, %12 : vector<2x128xf32>
    %c0_10 = arith.constant 0 : index
    %c2 = arith.constant 2 : index
    %c0_11 = arith.constant 0 : index
    %c0_12 = arith.constant 0 : index
    %14 = vector.load %arg2[%c0_10, %c2, %c0_11, %c0_12] : memref<1x4x2x128xf32, #tpu.memory_space<vmem>>, vector<1x1x2x128xf32>
    %15 = vector.shape_cast %14 : vector<1x1x2x128xf32> to vector<2x128xf32>
    %16 = arith.maximumf %13, %15 : vector<2x128xf32>
    %c0_13 = arith.constant 0 : index
    %c3 = arith.constant 3 : index
    %c0_14 = arith.constant 0 : index
    %c0_15 = arith.constant 0 : index
    %17 = vector.load %arg2[%c0_13, %c3, %c0_14, %c0_15] : memref<1x4x2x128xf32, #tpu.memory_space<vmem>>, vector<1x1x2x128xf32>
    %18 = vector.shape_cast %17 : vector<1x1x2x128xf32> to vector<2x128xf32>
    %19 = arith.maximumf %16, %18 : vector<2x128xf32>
    %cst = arith.constant 0.000000e+00 : f32
    %20 = vector.broadcast %cst : f32 to vector<2x128xf32>
    %cst_16 = arith.constant 0.000000e+00 : f32
    %21 = vector.broadcast %cst_16 : f32 to vector<2x128xf32>
    %c0_17 = arith.constant 0 : index
    %c0_18 = arith.constant 0 : index
    %c0_19 = arith.constant 0 : index
    %c0_20 = arith.constant 0 : index
    %22 = vector.load %arg2[%c0_17, %c0_18, %c0_19, %c0_20] : memref<1x4x2x128xf32, #tpu.memory_space<vmem>>, vector<1x1x2x128xf32>
    %23 = vector.shape_cast %22 : vector<1x1x2x128xf32> to vector<2x128xf32>
    %24 = arith.subf %23, %19 : vector<2x128xf32>
    %25 = math.exp %24 : vector<2x128xf32>
    %26 = arith.addf %20, %25 : vector<2x128xf32>
    %c0_i32_21 = arith.constant 0 : i32
    %27 = vector.broadcast %c0_i32_21 : i32 to vector<2x128xi32>
    %28 = arith.cmpi eq, %8, %27 : vector<2x128xi32>
    %cst_22 = arith.constant 0.000000e+00 : f32
    %29 = vector.broadcast %cst_22 : f32 to vector<2x128xf32>
    %30 = arith.select %28, %23, %29 : vector<2x128xi1>, vector<2x128xf32>
    %31 = arith.addf %21, %30 : vector<2x128xf32>
    %c0_23 = arith.constant 0 : index
    %c1_24 = arith.constant 1 : index
    %c0_25 = arith.constant 0 : index
    %c0_26 = arith.constant 0 : index
    %32 = vector.load %arg2[%c0_23, %c1_24, %c0_25, %c0_26] : memref<1x4x2x128xf32, #tpu.memory_space<vmem>>, vector<1x1x2x128xf32>
    %33 = vector.shape_cast %32 : vector<1x1x2x128xf32> to vector<2x128xf32>
    %34 = arith.subf %33, %19 : vector<2x128xf32>
    %35 = math.exp %34 : vector<2x128xf32>
    %36 = arith.addf %26, %35 : vector<2x128xf32>
    %c1_i32 = arith.constant 1 : i32
    %37 = vector.broadcast %c1_i32 : i32 to vector<2x128xi32>
    %38 = arith.cmpi eq, %8, %37 : vector<2x128xi32>
    %cst_27 = arith.constant 0.000000e+00 : f32
    %39 = vector.broadcast %cst_27 : f32 to vector<2x128xf32>
    %40 = arith.select %38, %33, %39 : vector<2x128xi1>, vector<2x128xf32>
    %41 = arith.addf %31, %40 : vector<2x128xf32>
    %c0_28 = arith.constant 0 : index
    %c2_29 = arith.constant 2 : index
    %c0_30 = arith.constant 0 : index
    %c0_31 = arith.constant 0 : index
    %42 = vector.load %arg2[%c0_28, %c2_29, %c0_30, %c0_31] : memref<1x4x2x128xf32, #tpu.memory_space<vmem>>, vector<1x1x2x128xf32>
    %43 = vector.shape_cast %42 : vector<1x1x2x128xf32> to vector<2x128xf32>
    %44 = arith.subf %43, %19 : vector<2x128xf32>
    %45 = math.exp %44 : vector<2x128xf32>
    %46 = arith.addf %36, %45 : vector<2x128xf32>
    %c2_i32 = arith.constant 2 : i32
    %47 = vector.broadcast %c2_i32 : i32 to vector<2x128xi32>
    %48 = arith.cmpi eq, %8, %47 : vector<2x128xi32>
    %cst_32 = arith.constant 0.000000e+00 : f32
    %49 = vector.broadcast %cst_32 : f32 to vector<2x128xf32>
    %50 = arith.select %48, %43, %49 : vector<2x128xi1>, vector<2x128xf32>
    %51 = arith.addf %41, %50 : vector<2x128xf32>
    %c0_33 = arith.constant 0 : index
    %c3_34 = arith.constant 3 : index
    %c0_35 = arith.constant 0 : index
    %c0_36 = arith.constant 0 : index
    %52 = vector.load %arg2[%c0_33, %c3_34, %c0_35, %c0_36] : memref<1x4x2x128xf32, #tpu.memory_space<vmem>>, vector<1x1x2x128xf32>
    %53 = vector.shape_cast %52 : vector<1x1x2x128xf32> to vector<2x128xf32>
    %54 = arith.subf %53, %19 : vector<2x128xf32>
    %55 = math.exp %54 : vector<2x128xf32>
    %56 = arith.addf %46, %55 : vector<2x128xf32>
    %c3_i32 = arith.constant 3 : i32
    %57 = vector.broadcast %c3_i32 : i32 to vector<2x128xi32>
    %58 = arith.cmpi eq, %8, %57 : vector<2x128xi32>
    %cst_37 = arith.constant 0.000000e+00 : f32
    %59 = vector.broadcast %cst_37 : f32 to vector<2x128xf32>
    %60 = arith.select %58, %53, %59 : vector<2x128xi1>, vector<2x128xf32>
    %61 = arith.addf %51, %60 : vector<2x128xf32>
    %62 = math.log %56 : vector<2x128xf32>
    %63 = arith.addf %19, %62 : vector<2x128xf32>
    %64 = arith.subf %63, %61 : vector<2x128xf32>
    %cst_38 = arith.constant 0.000000e+00 : f32
    %65 = vector.broadcast %cst_38 : f32 to vector<2x128xf32>
    %66 = arith.select %6, %64, %65 : vector<2x128xi1>, vector<2x128xf32>
    %cst_39 = arith.constant dense<0.000000e+00> : vector<128xf32>
    %67 = vector.multi_reduction <add>, %66, %cst_39 [0] : vector<2x128xf32> to vector<128xf32>
    %68 = vector.shape_cast %67 : vector<128xf32> to vector<1x128xf32>
    %cst_40 = arith.constant 1.000000e+00 : f32
    %cst_41 = arith.constant 0.000000e+00 : f32
    %69 = vector.broadcast %cst_40 : f32 to vector<2x128xf32>
    %70 = vector.broadcast %cst_41 : f32 to vector<2x128xf32>
    %71 = arith.select %6, %69, %70 : vector<2x128xi1>, vector<2x128xf32>
    %cst_42 = arith.constant dense<0.000000e+00> : vector<128xf32>
    %72 = vector.multi_reduction <add>, %71, %cst_42 [0] : vector<2x128xf32> to vector<128xf32>
    %73 = vector.shape_cast %72 : vector<128xf32> to vector<1x128xf32>
    %74 = tpu.concatenate %68, %73 in 0 : vector<1x128xf32>, vector<1x128xf32> -> vector<2x128xf32>
    %75 = vector.shape_cast %74 : vector<2x128xf32> to vector<1x2x128xf32>
    %c0_43 = arith.constant 0 : index
    %c0_44 = arith.constant 0 : index
    %c0_45 = arith.constant 0 : index
    %76 = vector.load %arg4[%c0_43, %c0_44, %c0_45] : memref<1x2x128xf32, #tpu.memory_space<vmem>>, vector<1x2x128xf32>
    tpu.vector_store %arg4[%c0_43, %c0_44, %c0_45], %75 {strides = array<i32>} : memref<1x2x128xf32, #tpu.memory_space<vmem>>, vector<1x2x128xf32>,
    return
  }
  func.func @transform_0(%arg0: i32, %arg1: i32) -> (i32, i32, i32, i32) {
    %c0_i32 = arith.constant 0 : i32
    %c0_i32_0 = arith.constant 0 : i32
    %c0_i32_1 = arith.constant 0 : i32
    return %arg0, %c0_i32, %arg1, %c0_i32_0 : i32, i32, i32, i32
  }
  func.func @transform_1(%arg0: i32, %arg1: i32) -> (i32, i32, i32) {
    %c0_i32 = arith.constant 0 : i32
    %c0_i32_0 = arith.constant 0 : i32
    return %arg0, %arg1, %c0_i32 : i32, i32, i32
  }
  func.func @transform_2(%arg0: i32, %arg1: i32) -> (i32, i32, i32) {
    %c1_i32 = arith.constant 1 : i32
    %0 = arith.muli %arg0, %c1_i32 : i32
    %1 = arith.addi %0, %arg1 : i32
    %c0_i32 = arith.constant 0 : i32
    %c0_i32_0 = arith.constant 0 : i32
    %c0_i32_1 = arith.constant 0 : i32
    return %1, %c0_i32, %c0_i32_0 : i32, i32, i32
  }
}

</mosaic_0001>

<llo_original>
// kernel: tpu_custom_call.1
$region0: #{tpu_custom_call.1}
  #allocation0 [shape = 'u32[]', space=smem, size = 0x4, offset = 0x4, fixed_abs, tag = 'smem constant byte address 0x4 - core index']
  #allocation1 [shape = 'u32[72,128]{1,0:T(1,128)}', space=vmem, size = 0x9000, scoped, tag = 'internal scratch']
  %s0 = inlined_call_operand.hbm [shape: f32[2,4,2,128], index: 0, kind: input, shape index: {}]
  %s1 = inlined_call_operand.hbm [shape: s32[2,2,128], index: 1, kind: input, shape index: {}]
  %s2 = inlined_call_operand.hbm [shape: f32[2,2,128], index: 2, kind: output, shape index: {}]
  %s3 = sld [smem:[#allocation0]]
  $region49: #{tpu_custom_call.1} parent=0
    _
  %s5 = ssub.s32 1, %s3
  %s6 = scalar_select 0, %s5, %s3
  $region1: #{tpu_custom_call.1} parent=0
    #allocation2 [shape = 'u8[8192]{0}', space=vmem, size = 0x2000, scoped, tag = 'input window, operand 0']
    #allocation3 [shape = 's32[2]{0}', space=sflag, size = 0x8, scoped, tag = 'scoped memory for tpu_custom_call.1']
    #allocation4 [shape = 's32[2]{0}', space=sflag, size = 0x8, scoped, tag = 'scoped memory for tpu_custom_call.1']
    #allocation5 [shape = 'u8[2048]{0}', space=vmem, size = 0x800, scoped, tag = 'input window, operand 1']
    #allocation6 [shape = 's32[2]{0}', space=sflag, size = 0x8, scoped, tag = 'scoped memory for tpu_custom_call.1']
    #allocation7 [shape = 'u8[2048]{0}', space=vmem, size = 0x800, scoped, tag = 'output window, operand 0']
    %7 = vsyncpa [#allocation3], 0
    %s8 = scalar_lea.sflag [#allocation3], 1
    %9 = vsyncpa %s8, 0
    %10 = vsyncpa [#allocation6], 0
    %s11 = scalar_lea.sflag [#allocation6], 1
    %12 = vsyncpa %s11, 0
    %13 = vsyncpa [#allocation4], 0
    %s14 = scalar_lea.sflag [#allocation4], 1
    %15 = vsyncpa %s14, 0
    loop: start=0, step=1, limit=4
    $region2: #{tpu_custom_call.1} parent=1 // loop_pre_header
      _
    $region3: #{tpu_custom_call.1} parent=1 // loop_header
      %s17 = sphi 0, %s21
      %p18 = scmp.ge.s32.totalorder %s17, 4
      %s24 = sphi 0, %s36
      %s25 = sphi 0, %s32
      %s26 = sphi 0, %s24
      %s27 = sphi 0, %s25
      %s28 = sphi 0, %s26
      %s29 = sphi 0, %s27
      %s41 = sphi 0, %s43
      %s44 = sphi 0, %s41
      %s45 = sphi 0, %s44
      %s61 = sphi 0, %s45
      %s69 = sphi 0, %s71
      %s72 = sphi 0, %s69
      %s73 = sphi 0, %s72
      %s89 = sphi 0, %s73
      %s97 = sphi 0, %s99
      %s100 = sphi 0, %s97
      %s101 = sphi 0, %s100
      %s117 = sphi 0, %s101
    $region4: #{tpu_custom_call.1} parent=1 // loop_header_branch
      %20 = sbr.rel (%p18) target = $region8
    $region5: #{tpu_custom_call.1} parent=1 // loop_body
      %s22 = ssub.s32 %s17, 1
      %s23 = ssub.s32 %s17, 2
      %s30 = sadd.s32 1, %s25
      %p31 = scmp.ge.s32.totalorder %s30, 1
      %s32 = scalar_select %p31, 0, %s30
      %s33 = sadd.s32 1, %s24
      %s34 = scalar_select %p31, %s33, %s24
      %p35 = scmp.ge.s32.totalorder %s34, 2
      %s36 = scalar_select %p35, 0, %s34
      %s37 = ssub.s32 %s24, %s36
      %s38 = ssub.s32 %s25, %s32
      %s39 = sor.u32 %s37, %s38
      %p40 = scmp.eq.s32.totalorder %s39, 0
      %s42 = sadd.s32 %s41, 1
      %s43 = scalar_select %p40, %s41, %s42
      %p46 = pneg %p40
      %p47 = scmp.eq.s32.totalorder %s17, 1
      %p48 = por %p46, %p47
      %p49 = scmp.ne.s32.totalorder %s41, %s44
      %p50 = scmp.eq.s32.totalorder %s17, 0
      %p51 = por %p49, %p50
      %p52 = scmp.ne.s32.totalorder %s41, %s44
      %p53 = scmp.eq.s32.totalorder %s22, 1
      %p54 = por %p52, %p53
      %p55 = scmp.ne.s32.totalorder %s44, %s45
      %p56 = scmp.eq.s32.totalorder %s22, 0
      %p57 = por %p55, %p56
      %p58 = scmp.ne.s32.totalorder %s44, %s45
      %p59 = scmp.eq.s32.totalorder %s23, 1
      %p60 = por %p58, %p59
      %p62 = scmp.ne.s32.totalorder %s45, %s61
      %p63 = scmp.eq.s32.totalorder %s23, 0
      %p64 = por %p62, %p63
      %s65 = ssub.s32 %s24, %s36
      %s66 = ssub.s32 %s25, %s32
      %s67 = sor.u32 %s65, %s66
      %p68 = scmp.eq.s32.totalorder %s67, 0
      %s70 = sadd.s32 %s69, 1
      %s71 = scalar_select %p68, %s69, %s70
      %p74 = pneg %p68
      %p75 = scmp.eq.s32.totalorder %s17, 1
      %p76 = por %p74, %p75
      %p77 = scmp.ne.s32.totalorder %s69, %s72
      %p78 = scmp.eq.s32.totalorder %s17, 0
      %p79 = por %p77, %p78
      %p80 = scmp.ne.s32.totalorder %s69, %s72
      %p81 = scmp.eq.s32.totalorder %s22, 1
      %p82 = por %p80, %p81
      %p83 = scmp.ne.s32.totalorder %s72, %s73
      %p84 = scmp.eq.s32.totalorder %s22, 0
      %p85 = por %p83, %p84
      %p86 = scmp.ne.s32.totalorder %s72, %s73
      %p87 = scmp.eq.s32.totalorder %s23, 1
      %p88 = por %p86, %p87
      %p90 = scmp.ne.s32.totalorder %s73, %s89
      %p91 = scmp.eq.s32.totalorder %s23, 0
      %p92 = por %p90, %p91
      %s93 = sadd.s32 %s24, %s25
      %s94 = sadd.s32 %s36, %s32
      %s95 = ssub.s32 %s93, %s94
      %p96 = scmp.eq.s32.totalorder %s95, 0
      %s98 = sadd.s32 %s97, 1
      %s99 = scalar_select %p96, %s97, %s98
      %p102 = pneg %p96
      %p103 = scmp.eq.s32.totalorder %s17, 1
      %p104 = por %p102, %p103
      %p105 = scmp.ne.s32.totalorder %s97, %s100
      %p106 = scmp.eq.s32.totalorder %s17, 0
      %p107 = por %p105, %p106
      %p108 = scmp.ne.s32.totalorder %s97, %s100
      %p109 = scmp.eq.s32.totalorder %s22, 1
      %p110 = por %p108, %p109
      %p111 = scmp.ne.s32.totalorder %s100, %s101
      %p112 = scmp.eq.s32.totalorder %s22, 0
      %p113 = por %p111, %p112
      %p114 = scmp.ne.s32.totalorder %s100, %s101
      %p115 = scmp.eq.s32.totalorder %s23, 1
      %p116 = por %p114, %p115
      %p118 = scmp.ne.s32.totalorder %s101, %s117
      %p119 = scmp.eq.s32.totalorder %s23, 0
      %p120 = por %p118, %p119
      %p121 = scmp.le.s32.totalorder 1, %s17
      %p122 = scmp.lt.s32.totalorder %s17, 3
      %p123 = pnand %p121, %p122
      %p124 = pneg %p123
      // Predicated region
      $region9: #{tpu_custom_call.1} parent=5 // pred_check
        _
      $region10: #{tpu_custom_call.1} parent=5 // pred_check_branch
        %126 = sbr.rel (%p123) target = $region12
      $region11: #{tpu_custom_call.1} parent=5 // pred_region
        %s127 = ssub.s32 %s17, 1
      $region12: #{tpu_custom_call.1} parent=5 // pred_fallthru
        _
      %p128 = scmp.lt.s32.totalorder %s17, 2
      // Predicated region
      $region13: #{tpu_custom_call.1} parent=5 // pred_check
        %p129 = pneg %p128
      $region14: #{tpu_custom_call.1} parent=5 // pred_check_branch
        %131 = sbr.rel (%p129) target = $region16
      $region15: #{tpu_custom_call.1} parent=5 // pred_region
        // Predicated region
        $region17: #{tpu_custom_call.1} parent=15 // pred_check
          %p132 = pneg %p51
        $region18: #{tpu_custom_call.1} parent=15 // pred_check_branch
          %134 = sbr.rel (%p132) target = $region20
        $region19: #{tpu_custom_call.1} parent=15 // pred_region
          %s135 = sand.u32 %s41, 1
          %s136 = scalar_lea.sflag [#allocation3], %s135
          %s137 = sand.u32 %s41, 1
          %s138 = smul.addr %s137, 8
          %s139 = scalar_lea.vmem [#allocation2], %s138
          %141 = vsyncadd %s136, 0
          %s142 = smul.addr %s24, 4
          %s143 = sadd.s32 %s25, %s142
          %s144 = smul.addr %s143, 2
          %s145 = scalar_lea.hbm %s0, %s144
          %s146 = sshll.u32 %s145, 4
          %s147 = int_to_ptr.hbm [resolvable:$true] %s146
          %s148 = sshll.u32 %s139, 4
          %s149 = int_to_ptr.vmem [resolvable:$true] %s148
          %154 = dma.hbm_to_vmem [thread:$0]  %s147, 128, %s149, %s136, 32, 32, 2
        $region20: #{tpu_custom_call.1} parent=15 // pred_fallthru
          _
        // Predicated region
        $region21: #{tpu_custom_call.1} parent=15 // pred_check
          %p155 = pneg %p79
        $region22: #{tpu_custom_call.1} parent=15 // pred_check_branch
          %157 = sbr.rel (%p155) target = $region24
        $region23: #{tpu_custom_call.1} parent=15 // pred_region
          %s158 = sand.u32 %s69, 1
          %s159 = scalar_lea.sflag [#allocation6], %s158
          %s160 = sand.u32 %s69, 1
          %s161 = smul.addr %s160, 2
          %s162 = scalar_lea.vmem [#allocation5], %s161
          %164 = vsyncadd %s159, 0
          %s165 = sadd.s32 %s25, %s24
          %s166 = smul.addr %s165, 2
          %s167 = scalar_lea.hbm %s1, %s166
          %s169 = sshll.u32 %s167, 4
          %s170 = int_to_ptr.hbm [resolvable:$true] %s169
          %s171 = sshll.u32 %s162, 4
          %s172 = int_to_ptr.vmem [resolvable:$true] %s171
          %174 = dma.hbm_to_vmem [thread:$0]  %s170, 32, %s172, %s159
        $region24: #{tpu_custom_call.1} parent=15 // pred_fallthru
          _
      $region16: #{tpu_custom_call.1} parent=5 // pred_fallthru
        _
      %p175 = scmp.le.s32.totalorder 1, %s17
      %p176 = scmp.lt.s32.totalorder %s17, 3
      %p177 = pnand %p175, %p176
      %p178 = pneg %p177
      // Predicated region
      $region25: #{tpu_custom_call.1} parent=5 // pred_check
        _
      $region26: #{tpu_custom_call.1} parent=5 // pred_check_branch
        %180 = sbr.rel (%p177) target = $region28
      $region27: #{tpu_custom_call.1} parent=5 // pred_region
        %s181 = ssub.s32 %s17, 1
        %s182 = sand.u32 %s44, 1
        %s183 = scalar_lea.sflag [#allocation3], %s182
        %s184 = sand.u32 %s44, 1
        %s185 = smul.addr %s184, 8
        %s186 = scalar_lea.vmem [#allocation2], %s185
        // Predicated region
        $region29: #{tpu_custom_call.1} parent=27 // pred_check
          %p187 = pneg %p57
        $region30: #{tpu_custom_call.1} parent=27 // pred_check_branch
          %189 = sbr.rel (%p187) target = $region32
        $region31: #{tpu_custom_call.1} parent=27 // pred_region
          %191 = dma.done %s183, 128
        $region32: #{tpu_custom_call.1} parent=27 // pred_fallthru
          _
        %s192 = sand.u32 %s72, 1
        %s193 = scalar_lea.sflag [#allocation6], %s192
        %s194 = sand.u32 %s72, 1
        %s195 = smul.addr %s194, 2
        %s196 = scalar_lea.vmem [#allocation5], %s195
        // Predicated region
        $region33: #{tpu_custom_call.1} parent=27 // pred_check
          %p197 = pneg %p85
        $region34: #{tpu_custom_call.1} parent=27 // pred_check_branch
          %199 = sbr.rel (%p197) target = $region36
        $region35: #{tpu_custom_call.1} parent=27 // pred_region
          %201 = dma.done %s193, 32
        $region36: #{tpu_custom_call.1} parent=27 // pred_fallthru
          _
        %s202 = sand.u32 %s44, 1
        %s203 = scalar_lea.sflag [#allocation3], %s202
        %s204 = sand.u32 %s44, 1
        %s205 = smul.addr %s204, 8
        %s206 = scalar_lea.vmem [#allocation2], %s205
        %p207 = pneg %p57
        %p208 = pneg %p54
        %s209 = sand.u32 %s72, 1
        %s210 = scalar_lea.sflag [#allocation6], %s209
        %s211 = sand.u32 %s72, 1
        %s212 = smul.addr %s211, 2
        %s213 = scalar_lea.vmem [#allocation5], %s212
        %p214 = pneg %p85
        %p215 = pneg %p82
        %p216 = pneg %p113
        %p217 = pneg %p110
        %s218 = sand.u32 %s100, 1
        %s219 = scalar_lea.sflag [#allocation4], %s218
        %s220 = sand.u32 %s100, 1
        %s221 = smul.addr %s220, 2
        %s222 = scalar_lea.vmem [#allocation7], %s221
        %s223 = sadd.s32 %s26, %s27
        %v224 = vld [vmem:[%s196] sm:$0x3]
        %vm225 = vcmp.ge.s32.totalorder %v224, 0
        %vm226 = vcmp.ne.s32.totalorder %v224, 255
        %vm227 = vmand %vm225, %vm226
        %v228 = vsel %vm227, %v224, 0
        %v229 = vld [vmem:[%s186] sm:$0x3]
        %s230 = scalar_lea.vmem %s186, 2 [#allocation2]
        %v231 = vld [vmem:[%s230] sm:$0x3]
        %v232 = vmax.f32 %v229, %v231
        %s233 = scalar_lea.vmem %s186, 4 [#allocation2]
        %v234 = vld [vmem:[%s233] sm:$0x3]
        %v235 = vmax.f32 %v232, %v234
        %s236 = scalar_lea.vmem %s186, 6 [#allocation2]
        %v237 = vld [vmem:[%s236] sm:$0x3]
        %v238 = vmax.f32 %v235, %v237
        %v239 = vsub.f32 %v229, %v238
        %v240 = vmul.f32 %v239, 1.442695
        %v241 = vpow.pop %v240
        %v242 = vadd.f32 %v241, 0.0
        %vm243 = vcmp.eq.s32.totalorder %v228, 0
        %v244 = vsel %vm243, %v229, 0.0
        %v245 = vadd.f32 %v244, 0.0
        %v246 = vsub.f32 %v231, %v238
        %v247 = vmul.f32 %v246, 1.442695
        %v248 = vpow.pop %v247
        %v249 = vadd.f32 %v242, %v248
        %vm250 = vcmp.eq.s32.totalorder %v228, 1
        %v251 = vsel %vm250, %v231, 0.0
        %v252 = vadd.f32 %v245, %v251
        %v253 = vsub.f32 %v234, %v238
        %v254 = vmul.f32 %v253, 1.442695
        %v255 = vpow.pop %v254
        %v256 = vadd.f32 %v249, %v255
        %vm257 = vcmp.eq.s32.totalorder %v228, 2
        %v258 = vsel %vm257, %v234, 0.0
        %v259 = vadd.f32 %v252, %v258
        %v260 = vsub.f32 %v237, %v238
        %v261 = vmul.f32 %v260, 1.442695
        %v262 = vpow.pop %v261
        %v263 = vadd.f32 %v256, %v262
        %vm264 = vcmp.eq.s32.totalorder %v228, 3
        %v265 = vsel %vm264, %v237, 0.0
        %v266 = vadd.f32 %v259, %v265
        %v267 = vlog2.pop %v263
        %v268 = vmul.f32 %v267, 0.6931472
        %v269 = vadd.f32 %v238, %v268
        %v270 = vsub.f32 %v269, %v266
        %v271 = vsel %vm227, %v270, 0.0
        %vm272 = vcmask 1041408
        %v273 = vsel %vm272, %v271, 0.0
        %v274 = vrot.slane %v273, 4
        %v275 = vadd.f32 %v273, %v274
        %v276 = vrot.slane %v275, 2
        %v277 = vadd.f32 %v275, %v276
        %v278 = vrot.slane %v277, 1
        %v279 = vadd.f32 %v277, %v278
        %v280 = vsel %vm227, 1.0, 0.0
        %v281 = vsel %vm272, %v280, 0.0
        %v282 = vrot.slane %v281, 4
        %v283 = vadd.f32 %v281, %v282
        %v284 = vrot.slane %v283, 2
        %v285 = vadd.f32 %v283, %v284
        %v286 = vrot.slane %v285, 1
        %v287 = vadd.f32 %v285, %v286
        %vm288 = vcmask 1040384
        %v289 = vsel %vm288, %v279, %v287
        %290 = vst [vmem:[%s222] sm:$0x3] %v289
        %s291 = sand.u32 %s100, 1
        %s292 = scalar_lea.sflag [#allocation4], %s291
        %s293 = sand.u32 %s100, 1
        %s294 = smul.addr %s293, 2
        %s295 = scalar_lea.vmem [#allocation7], %s294
        // Predicated region
        $region37: #{tpu_custom_call.1} parent=27 // pred_check
          %p296 = pneg %p110
        $region38: #{tpu_custom_call.1} parent=27 // pred_check_branch
          %298 = sbr.rel (%p296) target = $region40
        $region39: #{tpu_custom_call.1} parent=27 // pred_region
          %s299 = sadd.s32 %s26, %s27
          %301 = vsyncadd %s292, 0
          %s302 = smul.addr %s299, 2
          %s303 = scalar_lea.hbm %s2, %s302
          %s305 = sshll.u32 %s295, 4
          %s306 = int_to_ptr.vmem [resolvable:$true] %s305
          %s307 = sshll.u32 %s303, 4
          %s308 = int_to_ptr.hbm [resolvable:$true] %s307
          %310 = dma.vmem_to_hbm [thread:$0]  %s306, 32, %s308, %s292
        $region40: #{tpu_custom_call.1} parent=27 // pred_fallthru
          _
      $region28: #{tpu_custom_call.1} parent=5 // pred_fallthru
        _
      %p311 = scmp.le.s32.totalorder 2, %s17
      // Predicated region
      $region41: #{tpu_custom_call.1} parent=5 // pred_check
        %p312 = pneg %p311
      $region42: #{tpu_custom_call.1} parent=5 // pred_check_branch
        %314 = sbr.rel (%p312) target = $region44
      $region43: #{tpu_custom_call.1} parent=5 // pred_region
        %s315 = ssub.s32 %s17, 2
        // Predicated region
        $region45: #{tpu_custom_call.1} parent=43 // pred_check
          %p316 = pneg %p116
        $region46: #{tpu_custom_call.1} parent=43 // pred_check_branch
          %318 = sbr.rel (%p316) target = $region48
        $region47: #{tpu_custom_call.1} parent=43 // pred_region
          %s319 = sand.u32 %s101, 1
          %s320 = scalar_lea.sflag [#allocation4], %s319
          %s321 = sand.u32 %s101, 1
          %s322 = smul.addr %s321, 2
          %s323 = scalar_lea.vmem [#allocation7], %s322
          %325 = dma.done %s320, 32
        $region48: #{tpu_custom_call.1} parent=43 // pred_fallthru
          _
      $region44: #{tpu_custom_call.1} parent=5 // pred_fallthru
        _
    $region6: #{tpu_custom_call.1} parent=1 // loop_footer
      %s21 = sadd.s32 1, %s17
    $region7: #{tpu_custom_call.1} parent=1 // loop_footer_branch
      %16 = sbr.rel target = $region3
    $region8: #{tpu_custom_call.1} parent=1 // loop_exit
      _
    %326 = vsyncpa [#allocation3], 1
    %s327 = scalar_lea.sflag [#allocation3], 1
    %328 = vsyncpa %s327, 1
    %329 = vsyncpa [#allocation6], 1
    %s330 = scalar_lea.sflag [#allocation6], 1
    %331 = vsyncpa %s330, 1
    %332 = vsyncpa [#allocation4], 1
    %s333 = scalar_lea.sflag [#allocation4], 1
    %334 = vsyncpa %s333, 1

</llo_original>
